<compile_context>
chip_gen: v6e
topology: v6e:2x2x1
jax: 0.10.0
libtpu: 0.0.40
codegen_flags: <defaults>
</compile_context>

<pallas_src>
import functools

import numpy as np
import jax
import jax.numpy as jnp
from jax.experimental import pallas as pl
from jax.experimental.pallas import tpu as pltpu


# ----------------------------------------------------------------------------
# HKO-7 evaluation config constants (cfg.HKO.EVALUATION.*) -- standard values
# used by the Precipitation_Nowcasting repo.
# ----------------------------------------------------------------------------
BALANCING_WEIGHTS = (1.0, 1.0, 2.0, 5.0, 10.0, 30.0)
THRESHOLDS_MM = (0.5, 2.0, 5.0, 10.0, 30.0)


def rainfall_to_pixel(rainfall_intensity, a=58.53, b=1.56):
    dBR = np.log10(rainfall_intensity) * 10.0
    dBZ = dBR * b + 10.0 * np.log10(a)
    return (dBZ + 10.0) / 70.0


PIXEL_THRESHOLDS = tuple(float(rainfall_to_pixel(t)) for t in THRESHOLDS_MM)


def _round_up(x, m):
    return ((x + m - 1) // m) * m


def _vmem_budget():
    """(physical VMEM bytes, vmem_limit_bytes to request)."""
    try:
        cap = int(pltpu.get_tpu_info().vmem_capacity_bytes)
    except Exception:
        cap = 64 << 20  # conservative fallback (v7x-sized)
    # 96 MiB on v5e/v6e (128 MiB physical), 48 MiB on v7x (64 MiB physical).
    vmem_limit = min((cap * 3) // 4, 96 << 20)
    return cap, vmem_limit


def _choose_tiles(R, N, tile_elems, small_vmem):
    """Pick (row_blk, col_blk).

    tile_elems = element budget per input tile (already accounts for the
    3 inputs x 2 pipeline buffers working set and the per-generation VMEM
    limit).  col_blk is the whole row when it fits (no mask, no accumulation
    pass); otherwise the largest 128-multiple divisor of N (no remainder
    mask); otherwise a 128-multiple with an in-kernel mask on the last block.
    """
    R8 = _round_up(R, 8)
    Np = _round_up(N, 128)
    # Widest column block such that at least 8 rows still fit in the budget.
    max_col = min(Np, 16384, max(128, ((tile_elems // 8) // 128) * 128))

    if N <= max_col:
        col_blk = N                       # single column block, no mask
    elif N % 128 == 0:
        col_blk = 128
        for cand in range(max_col, 127, -128):
            if N % cand == 0:             # exact divisor -> no remainder mask
                col_blk = cand
                break
    else:
        col_blk = max_col                 # last column block masked in-kernel

    row_blk = max(8, min(R8, ((tile_elems // col_blk) // 8) * 8, 512))

    if small_vmem and R8 >= 16:
        # v7x proxy (64 MiB VMEM, 2 TensorCores): keep >= 2 row blocks so the
        # "parallel" row axis shards across both cores.
        row_blk = min(row_blk, _round_up((R8 + 1) // 2, 8))
    return row_blk, col_blk


# ----------------------------------------------------------------------------
# Pallas kernel: per-row weighted sums of squared error and absolute error.
# Rows = flattened (S*B), cols = flattened (C*H*W).  Grid = (row_blk, col_blk)
# tiles; partial sums live in a lane-dense (row_blk, 128) VMEM scratch, the
# (row_blk, 1) output is written once at the last column block.
# ----------------------------------------------------------------------------
def _wmse_wmae_kernel(x_ref, t_ref, m_ref, mse_ref, mae_ref, mse_acc, mae_acc,
                      *, N, row_blk, col_blk, n_col_blocks):
    k = pl.program_id(1)

    x = x_ref[...].astype(jnp.float32)
    t = t_ref[...].astype(jnp.float32)
    m = m_ref[...].astype(jnp.float32)

    # Balancing weights: select-chain over ascending thresholds with absolute
    # weight values (5 cmp + 5 select), equivalent to the additive reference.
    w = jnp.where(t >= PIXEL_THRESHOLDS[0],
                  jnp.float32(BALANCING_WEIGHTS[1]),
                  jnp.float32(BALANCING_WEIGHTS[0]))
    for thr, bw in zip(PIXEL_THRESHOLDS[1:], BALANCING_WEIGHTS[2:]):
        w = jnp.where(t >= thr, jnp.float32(bw), w)
    w = w * m

    diff = x - t
    ad = jnp.abs(diff)
    wad = w * ad          # reused: mae = sum(wad), mse = sum(wad * ad)
    ae = wad
    se = wad * ad

    # Column-remainder mask (select -- not multiply -- so stale-VMEM NaNs in
    # padded lanes cannot poison valid rows).  Only traced when col_blk does
    # not divide N; _choose_tiles avoids that whenever it can.
    if (col_blk != N) and (N % col_blk != 0):
        col = (jax.lax.broadcasted_iota(jnp.int32, (row_blk, col_blk), 1)
               + k * col_blk)
        valid = col < N
        zero = jnp.float32(0.0)
        ae = jnp.where(valid, ae, zero)
        se = jnp.where(valid, se, zero)
    # NOTE: no row mask -- out-of-range rows only pollute output rows >= R,
    # which the wrapper slices off before taking the mean.

    if n_col_blocks == 1:
        # Whole row in one block: reduce straight into the output.
        mse_ref[...] = jnp.sum(se, axis=1, keepdims=True)
        mae_ref[...] = jnp.sum(ae, axis=1, keepdims=True)
    else:
        @pl.when(k == 0)
        def _init():
            mse_acc[...] = jnp.zeros_like(mse_acc)
            mae_acc[...] = jnp.zeros_like(mae_acc)

        # Lane-dense partial reduce: fold 128-lane groups with plain VALU adds
        # (no per-step cross-lane reduce, no narrow masked store).
        groups = col_blk // 128
        p_se = se[:, 0:128]
        p_ae = ae[:, 0:128]
        for g in range(1, groups):
            lo = g * 128
            p_se = p_se + se[:, lo:lo + 128]
            p_ae = p_ae + ae[:, lo:lo + 128]
        mse_acc[...] += p_se
        mae_acc[...] += p_ae

        @pl.when(k == n_col_blocks - 1)
        def _finalize():
            mse_ref[...] = jnp.sum(mse_acc[...], axis=1, keepdims=True)
            mae_ref[...] = jnp.sum(mae_acc[...], axis=1, keepdims=True)


def _row_sums(inp2d, tgt2d, msk2d, max_tile_elems=None):
    """inp2d/tgt2d/msk2d: (R, N) arrays (any float / int dtype; cast in-kernel).
    Returns per-row (R_out, 1) weighted-SE and weighted-AE sums (f32); rows
    >= R are garbage and must be sliced off by the caller."""
    R, N = inp2d.shape

    vmem_cap, vmem_limit = _vmem_budget()
    bpe = (inp2d.dtype.itemsize + tgt2d.dtype.itemsize + msk2d.dtype.itemsize)
    headroom = 6 << 20   # outputs, scratch, compiler-internal scratch
    tile_elems = max(8 * 128, (vmem_limit - headroom) // (2 * bpe))
    tile_elems = min(tile_elems, 2 << 20)   # ~8 MiB f32 per input tile, max
    if max_tile_elems is not None:
        tile_elems = max(8 * 128, min(tile_elems, int(max_tile_elems)))
    small_vmem = vmem_cap <= (64 << 20)     # v7x-like

    row_blk, col_blk = _choose_tiles(R, N, tile_elems, small_vmem)
    n_row_blocks = pl.cdiv(R, row_blk)
    n_col_blocks = pl.cdiv(N, col_blk)
    R_out = n_row_blocks * row_blk

    kernel = functools.partial(_wmse_wmae_kernel, N=N, row_blk=row_blk,
                               col_blk=col_blk, n_col_blocks=n_col_blocks)

    in_spec = pl.BlockSpec((row_blk, col_blk), lambda i, k: (i, k))
    out_spec = pl.BlockSpec((row_blk, 1), lambda i, k: (i, 0))

    in_bytes = bpe * R * N
    cost = pl.CostEstimate(
        flops=int(16 * R * N),
        transcendentals=0,
        bytes_accessed=int(in_bytes + 2 * 4 * R_out),
    )

    mse_rows, mae_rows = pl.pallas_call(
        kernel,
        out_shape=(
            jax.ShapeDtypeStruct((R_out, 1), jnp.float32),
            jax.ShapeDtypeStruct((R_out, 1), jnp.float32),
        ),
        grid_spec=pltpu.PrefetchScalarGridSpec(
            num_scalar_prefetch=0,
            grid=(n_row_blocks, n_col_blocks),
            in_specs=[in_spec, in_spec, in_spec],
            out_specs=[out_spec, out_spec],
            scratch_shapes=[pltpu.VMEM((row_blk, 128), jnp.float32),
                            pltpu.VMEM((row_blk, 128), jnp.float32)],
        ),
        compiler_params=pltpu.CompilerParams(
            dimension_semantics=("parallel", "arbitrary"),
            vmem_limit_bytes=int(vmem_limit),
        ),
        cost_estimate=cost,
    )(inp2d, tgt2d, msk2d)
    return mse_rows, mae_rows


# ----------------------------------------------------------------------------
# Module-equivalent wrapper.  bf16 input/target and int8 masks are streamed
# as-is (cast happens in-kernel after the load) -- callers should NOT
# materialize a float32 mask; the kernel is HBM-bandwidth bound.
# ----------------------------------------------------------------------------
def weighted_mse_mae(input, target, mask,
                     mse_weight=1.0, mae_weight=1.0,
                     NORMAL_LOSS_GLOBAL_SCALE=5e-5, LAMBDA=None,
                     _max_tile_elems=None):
    S, B, C, H, W = input.shape
    R = S * B
    N = C * H * W

    if mask.dtype == jnp.bool_:
        mask = mask.astype(jnp.int8)   # keep mask traffic at 1 byte/elem

    # Reshape only -- no padding / dtype-widening copies in the wrapper.
    inp2d = input.reshape(R, N)
    tgt2d = target.reshape(R, N)
    msk2d = mask.reshape(R, N)

    mse_rows, mae_rows = _row_sums(inp2d, tgt2d, msk2d,
                                   max_tile_elems=_max_tile_elems)
    mse = mse_rows[:R, 0].reshape(S, B)
    mae = mae_rows[:R, 0].reshape(S, B)

    if LAMBDA is not None:
        w = 1.0 + LAMBDA * jnp.arange(S, dtype=jnp.float32)
        mse = mse * w[:, None]
        mae = mae * w[:, None]

    return NORMAL_LOSS_GLOBAL_SCALE * (
        mse_weight * jnp.mean(mse) + mae_weight * jnp.mean(mae)
    )


# ----------------------------------------------------------------------------
# Pure-JAX reference (mirrors the PyTorch forward exactly) for verification.
# Note: the kernel accumulates per-row sums sequentially in f32 across column
# blocks, which can drift slightly vs this reference for very large N.
# ----------------------------------------------------------------------------
def weighted_mse_mae_ref(input, target, mask,
                         mse_weight=1.0, mae_weight=1.0,
                         NORMAL_LOSS_GLOBAL_SCALE=5e-5, LAMBDA=None):
    input = input.astype(jnp.float32)
    target = target.astype(jnp.float32)
    weights = jnp.ones_like(input) * BALANCING_WEIGHTS[0]
    for i, thr in enumerate(PIXEL_THRESHOLDS):
        weights = weights + (BALANCING_WEIGHTS[i + 1] - BALANCING_WEIGHTS[i]) * (
            target >= thr
        ).astype(input.dtype)
    weights = weights * mask.astype(input.dtype)
    mse = jnp.sum(weights * (input - target) ** 2, axis=(2, 3, 4))
    mae = jnp.sum(weights * jnp.abs(input - target), axis=(2, 3, 4))
    if LAMBDA is not None:
        S = mse.shape[0]
        w = 1.0 + LAMBDA * jnp.arange(S, dtype=jnp.float32)
        mse = mse * w[:, None]
        mae = mae * w[:, None]
    return NORMAL_LOSS_GLOBAL_SCALE * (
        mse_weight * jnp.mean(mse) + mae_weight * jnp.mean(mae)
    )


if __name__ == "__main__":
    key = jax.random.PRNGKey(0)
    k1, k2, k3 = jax.random.split(key, 3)

    # 1) (S, B, C, H, W) = (seq, batch, channel, height, width), f32.
    S, B, C, H, W = 8, 2, 1, 16, 16
    input_ = jax.random.uniform(k1, (S, B, C, H, W), dtype=jnp.float32)
    target = jax.random.uniform(k2, (S, B, C, H, W), dtype=jnp.float32)
    mask = (jax.random.uniform(k3, (S, B, C, H, W)) > 0.2).astype(jnp.float32)

    loss = jax.block_until_ready(weighted_mse_mae(input_, target, mask))
    ref = weighted_mse_mae_ref(input_, target, mask)
    np.testing.assert_allclose(np.asarray(loss), np.asarray(ref),
                               rtol=2e-5, atol=1e-7)

    # 2) Remainder + LAMBDA path: shapes not divisible by (8, 128) tiles,
    #    exercising the full-row (no-mask) single-column-block path and the
    #    garbage-output-row slicing (no wrapper padding).
    S2, B2, C2, H2, W2 = 5, 2, 1, 15, 13
    k4, k5, k6 = jax.random.split(k1, 3)
    inp2 = jax.random.uniform(k4, (S2, B2, C2, H2, W2), dtype=jnp.float32)
    tgt2 = jax.random.uniform(k5, (S2, B2, C2, H2, W2), dtype=jnp.float32)
    msk2 = (jax.random.uniform(k6, (S2, B2, C2, H2, W2)) > 0.2).astype(jnp.float32)

    loss2 = jax.block_until_ready(weighted_mse_mae(inp2, tgt2, msk2, LAMBDA=0.5))
    ref2 = weighted_mse_mae_ref(inp2, tgt2, msk2, LAMBDA=0.5)
    np.testing.assert_allclose(np.asarray(loss2), np.asarray(ref2),
                               rtol=2e-5, atol=1e-7)

    # 3) bf16 input/target (half the HBM traffic); kernel casts after load.
    inp3 = input_.astype(jnp.bfloat16)
    tgt3 = target.astype(jnp.bfloat16)
    loss3 = jax.block_until_ready(weighted_mse_mae(inp3, tgt3, mask))
    ref3 = weighted_mse_mae_ref(inp3, tgt3, mask)
    np.testing.assert_allclose(np.asarray(loss3), np.asarray(ref3),
                               rtol=1e-4, atol=1e-7)

    # 4) Multi-column-block path (forced small tile budget): exercises the
    #    lane-dense (row_blk, 128) scratch accumulation, k==0 init and the
    #    last-block finalize, plus >1 row block on the parallel axis.
    S4, B4, C4, H4, W4 = 8, 2, 1, 32, 48
    k7, k8, k9 = jax.random.split(k2, 3)
    inp4 = jax.random.uniform(k7, (S4, B4, C4, H4, W4), dtype=jnp.float32)
    tgt4 = jax.random.uniform(k8, (S4, B4, C4, H4, W4), dtype=jnp.float32)
    msk4 = (jax.random.uniform(k9, (S4, B4, C4, H4, W4)) > 0.2).astype(jnp.float32)

    loss4 = jax.block_until_ready(
        weighted_mse_mae(inp4, tgt4, msk4, _max_tile_elems=4096))
    ref4 = weighted_mse_mae_ref(inp4, tgt4, msk4)
    np.testing.assert_allclose(np.asarray(loss4), np.asarray(ref4),
                               rtol=2e-5, atol=1e-7)

    print("KERNEL_OK")
</pallas_src>

<mosaic_0001>
module attributes {stable_mosaic.version = 11 : i64} {
  func.func @_wmse_wmae_kernel(%arg0: i32, %arg1: i32, %arg2: memref<8x256xf32, #tpu.memory_space<vmem>>, %arg3: memref<8x256xf32, #tpu.memory_space<vmem>>, %arg4: memref<8x256xf32, #tpu.memory_space<vmem>>, %arg5: memref<8x1xf32, #tpu.memory_space<vmem>>, %arg6: memref<8x1xf32, #tpu.memory_space<vmem>>, %arg7: memref<8x128xf32, #tpu.memory_space<vmem>>, %arg8: memref<8x128xf32, #tpu.memory_space<vmem>>) attributes {dimension_semantics = [#tpu.dimension_semantics<parallel>, #tpu.dimension_semantics<arbitrary>], iteration_bounds = array<i64: 2, 1>, scalar_prefetch = 0 : i64, scratch_operands = 2 : i64, tpu.core_type = #tpu.core_type<tc>, window_params = [{transform_indices = @transform_0, window_bounds = array<i64: 8, 256>}, {transform_indices = @transform_1, window_bounds = array<i64: 8, 256>}, {transform_indices = @transform_2, window_bounds = array<i64: 8, 256>}, {transform_indices = @transform_3, window_bounds = array<i64: 8, 1>}, {transform_indices = @transform_4, window_bounds = array<i64: 8, 1>}]} {
    %c0 = arith.constant 0 : index
    %c0_0 = arith.constant 0 : index
    %0 = vector.load %arg2[%c0, %c0_0] : memref<8x256xf32, #tpu.memory_space<vmem>>, vector<8x256xf32>
    %c0_1 = arith.constant 0 : index
    %c0_2 = arith.constant 0 : index
    %1 = vector.load %arg3[%c0_1, %c0_2] : memref<8x256xf32, #tpu.memory_space<vmem>>, vector<8x256xf32>
    %c0_3 = arith.constant 0 : index
    %c0_4 = arith.constant 0 : index
    %2 = vector.load %arg4[%c0_3, %c0_4] : memref<8x256xf32, #tpu.memory_space<vmem>>, vector<8x256xf32>
    %cst = arith.constant 0.32825309 : f32
    %3 = vector.broadcast %cst : f32 to vector<8x256xf32>
    %4 = arith.cmpf oge, %1, %3 : vector<8x256xf32>
    %cst_5 = arith.constant 1.000000e+00 : f32
    %cst_6 = arith.constant 1.000000e+00 : f32
    %5 = vector.broadcast %cst_5 : f32 to vector<8x256xf32>
    %6 = vector.broadcast %cst_6 : f32 to vector<8x256xf32>
    %7 = arith.select %4, %5, %6 : vector<8x256xi1>, vector<8x256xf32>
    %cst_7 = arith.constant 0.462426484 : f32
    %8 = vector.broadcast %cst_7 : f32 to vector<8x256xf32>
    %9 = arith.cmpf oge, %1, %8 : vector<8x256xf32>
    %cst_8 = arith.constant 2.000000e+00 : f32
    %10 = vector.broadcast %cst_8 : f32 to vector<8x256xf32>
    %11 = arith.select %9, %10, %7 : vector<8x256xi1>, vector<8x256xf32>
    %cst_9 = arith.constant 0.551110268 : f32
    %12 = vector.broadcast %cst_9 : f32 to vector<8x256xf32>
    %13 = arith.cmpf oge, %1, %12 : vector<8x256xf32>
    %cst_10 = arith.constant 5.000000e+00 : f32
    %14 = vector.broadcast %cst_10 : f32 to vector<8x256xf32>
    %15 = arith.select %13, %14, %11 : vector<8x256xi1>, vector<8x256xf32>
    %cst_11 = arith.constant 0.618196904 : f32
    %16 = vector.broadcast %cst_11 : f32 to vector<8x256xf32>
    %17 = arith.cmpf oge, %1, %16 : vector<8x256xf32>
    %cst_12 = arith.constant 1.000000e+01 : f32
    %18 = vector.broadcast %cst_12 : f32 to vector<8x256xf32>
    %19 = arith.select %17, %18, %15 : vector<8x256xi1>, vector<8x256xf32>
    %cst_13 = arith.constant 0.724526822 : f32
    %20 = vector.broadcast %cst_13 : f32 to vector<8x256xf32>
    %21 = arith.cmpf oge, %1, %20 : vector<8x256xf32>
    %cst_14 = arith.constant 3.000000e+01 : f32
    %22 = vector.broadcast %cst_14 : f32 to vector<8x256xf32>
    %23 = arith.select %21, %22, %19 : vector<8x256xi1>, vector<8x256xf32>
    %24 = arith.mulf %23, %2 : vector<8x256xf32>
    %25 = arith.subf %0, %1 : vector<8x256xf32>
    %26 = math.absf %25 : vector<8x256xf32>
    %27 = arith.mulf %24, %26 : vector<8x256xf32>
    %28 = arith.mulf %27, %26 : vector<8x256xf32>
    %cst_15 = arith.constant dense<0.000000e+00> : vector<8xf32>
    %29 = vector.multi_reduction <add>, %28, %cst_15 [1] : vector<8x256xf32> to vector<8xf32>
    %30 = vector.shape_cast %29 : vector<8xf32> to vector<8x1xf32>
    %c0_16 = arith.constant 0 : index
    %c0_17 = arith.constant 0 : index
    %31 = vector.load %arg5[%c0_16, %c0_17] : memref<8x1xf32, #tpu.memory_space<vmem>>, vector<8x1xf32>
    tpu.vector_store %arg5[%c0_16, %c0_17], %30 {strides = array<i32>} : memref<8x1xf32, #tpu.memory_space<vmem>>, vector<8x1xf32>,
    %cst_18 = arith.constant dense<0.000000e+00> : vector<8xf32>
    %32 = vector.multi_reduction <add>, %27, %cst_18 [1] : vector<8x256xf32> to vector<8xf32>
    %33 = vector.shape_cast %32 : vector<8xf32> to vector<8x1xf32>
    %c0_19 = arith.constant 0 : index
    %c0_20 = arith.constant 0 : index
    %34 = vector.load %arg6[%c0_19, %c0_20] : memref<8x1xf32, #tpu.memory_space<vmem>>, vector<8x1xf32>
    tpu.vector_store %arg6[%c0_19, %c0_20], %33 {strides = array<i32>} : memref<8x1xf32, #tpu.memory_space<vmem>>, vector<8x1xf32>,
    return
  }
  func.func @transform_0(%arg0: i32, %arg1: i32) -> (i32, i32) {
    %c0_i32 = arith.constant 0 : i32
    return %arg0, %arg1 : i32, i32
  }
  func.func @transform_1(%arg0: i32, %arg1: i32) -> (i32, i32) {
    %c0_i32 = arith.constant 0 : i32
    return %arg0, %arg1 : i32, i32
  }
  func.func @transform_2(%arg0: i32, %arg1: i32) -> (i32, i32) {
    %c0_i32 = arith.constant 0 : i32
    return %arg0, %arg1 : i32, i32
  }
  func.func @transform_3(%arg0: i32, %arg1: i32) -> (i32, i32) {
    %c0_i32 = arith.constant 0 : i32
    %c0_i32_0 = arith.constant 0 : i32
    return %arg0, %c0_i32 : i32, i32
  }
  func.func @transform_4(%arg0: i32, %arg1: i32) -> (i32, i32) {
    %c0_i32 = arith.constant 0 : i32
    %c0_i32_0 = arith.constant 0 : i32
    return %arg0, %c0_i32 : i32, i32
  }
}

</mosaic_0001>

<llo_original>
// kernel: tpu_custom_call.1
$region0: #{tpu_custom_call.1}
  #allocation0 [shape = 'u32[]', space=smem, size = 0x4, offset = 0x4, fixed_abs, tag = 'smem constant byte address 0x4 - core index']
  #allocation1 [shape = 'u32[144,128]{1,0:T(1,128)}', space=vmem, size = 0x12000, scoped, tag = 'internal scratch']
  #allocation2 [shape = 'f32[8,128]{1,0:T(8,128)}', space=vmem, size = 0x1000, scoped, tag = 'scratch operand']
  #allocation3 [shape = 'f32[8,128]{1,0:T(8,128)}', space=vmem, size = 0x1000, scoped, tag = 'scratch operand']
  %s0 = inlined_call_operand.hbm [shape: f32[16,256], index: 0, kind: input, shape index: {}]
  %s1 = inlined_call_operand.hbm [shape: f32[16,256], index: 1, kind: input, shape index: {}]
  %s2 = inlined_call_operand.hbm [shape: f32[16,256], index: 2, kind: input, shape index: {}]
  %s3 = inlined_call_operand.vmem [shape: f32[16,1], index: 3, kind: output, shape index: {0}]
  %s4 = inlined_call_operand.vmem [shape: f32[16,1], index: 4, kind: output, shape index: {1}]
  %5 = xla_tuple %s3, %s4
  %s6 = sld [smem:[#allocation0]]
  $region65: #{tpu_custom_call.1} parent=0
    _
  %s8 = ssub.s32 1, %s6
  %s9 = scalar_select 0, %s8, %s6
  $region1: #{tpu_custom_call.1} parent=0
    #allocation4 [shape = 'u8[16384]{0}', space=vmem, size = 0x4000, scoped, tag = 'input window, operand 0']
    #allocation5 [shape = 's32[2]{0}', space=sflag, size = 0x8, scoped, tag = 'scoped memory for tpu_custom_call.1']
    #allocation6 [shape = 'u8[16384]{0}', space=vmem, size = 0x4000, scoped, tag = 'input window, operand 1']
    #allocation7 [shape = 's32[2]{0}', space=sflag, size = 0x8, scoped, tag = 'scoped memory for tpu_custom_call.1']
    #allocation8 [shape = 'u8[16384]{0}', space=vmem, size = 0x4000, scoped, tag = 'input window, operand 2']
    %10 = vsyncpa [#allocation5], 0
    %s11 = scalar_lea.sflag [#allocation5], 1
    %12 = vsyncpa %s11, 0
    %13 = vsyncpa [#allocation7], 0
    %s14 = scalar_lea.sflag [#allocation7], 1
    %15 = vsyncpa %s14, 0
    loop: start=0, step=1, limit=4
    $region2: #{tpu_custom_call.1} parent=1 // loop_pre_header
      _
    $region3: #{tpu_custom_call.1} parent=1 // loop_header
      %s17 = sphi 0, %s21
      %p18 = scmp.ge.s32.totalorder %s17, 4
      %s24 = sphi 0, %s36
      %s25 = sphi 0, %s32
      %s26 = sphi 0, %s24
      %s27 = sphi 0, %s25
      %s28 = sphi 0, %s26
      %s29 = sphi 0, %s27
      %s41 = sphi 0, %s43
      %s44 = sphi 0, %s41
      %s45 = sphi 0, %s44
      %s61 = sphi 0, %s45
      %s69 = sphi 0, %s71
      %s72 = sphi 0, %s69
      %s73 = sphi 0, %s72
      %s89 = sphi 0, %s73
      %s97 = sphi 0, %s99
      %s100 = sphi 0, %s97
      %s101 = sphi 0, %s100
      %s117 = sphi 0, %s101
      %s123 = sphi 0, %s125
      %s126 = sphi 0, %s123
      %s127 = sphi 0, %s126
      %s143 = sphi 0, %s127
      %s149 = sphi 0, %s151
      %s152 = sphi 0, %s149
      %s153 = sphi 0, %s152
      %s169 = sphi 0, %s153
    $region4: #{tpu_custom_call.1} parent=1 // loop_header_branch
      %20 = sbr.rel (%p18) target = $region8
    $region5: #{tpu_custom_call.1} parent=1 // loop_body
      %s22 = ssub.s32 %s17, 1
      %s23 = ssub.s32 %s17, 2
      %s30 = sadd.s32 1, %s25
      %p31 = scmp.ge.s32.totalorder %s30, 1
      %s32 = scalar_select %p31, 0, %s30
      %s33 = sadd.s32 1, %s24
      %s34 = scalar_select %p31, %s33, %s24
      %p35 = scmp.ge.s32.totalorder %s34, 2
      %s36 = scalar_select %p35, 0, %s34
      %s37 = ssub.s32 %s24, %s36
      %s38 = ssub.s32 %s25, %s32
      %s39 = sor.u32 %s37, %s38
      %p40 = scmp.eq.s32.totalorder %s39, 0
      %s42 = sadd.s32 %s41, 1
      %s43 = scalar_select %p40, %s41, %s42
      %p46 = pneg %p40
      %p47 = scmp.eq.s32.totalorder %s17, 1
      %p48 = por %p46, %p47
      %p49 = scmp.ne.s32.totalorder %s41, %s44
      %p50 = scmp.eq.s32.totalorder %s17, 0
      %p51 = por %p49, %p50
      %p52 = scmp.ne.s32.totalorder %s41, %s44
      %p53 = scmp.eq.s32.totalorder %s22, 1
      %p54 = por %p52, %p53
      %p55 = scmp.ne.s32.totalorder %s44, %s45
      %p56 = scmp.eq.s32.totalorder %s22, 0
      %p57 = por %p55, %p56
      %p58 = scmp.ne.s32.totalorder %s44, %s45
      %p59 = scmp.eq.s32.totalorder %s23, 1
      %p60 = por %p58, %p59
      %p62 = scmp.ne.s32.totalorder %s45, %s61
      %p63 = scmp.eq.s32.totalorder %s23, 0
      %p64 = por %p62, %p63
      %s65 = ssub.s32 %s24, %s36
      %s66 = ssub.s32 %s25, %s32
      %s67 = sor.u32 %s65, %s66
      %p68 = scmp.eq.s32.totalorder %s67, 0
      %s70 = sadd.s32 %s69, 1
      %s71 = scalar_select %p68, %s69, %s70
      %p74 = pneg %p68
      %p75 = scmp.eq.s32.totalorder %s17, 1
      %p76 = por %p74, %p75
      %p77 = scmp.ne.s32.totalorder %s69, %s72
      %p78 = scmp.eq.s32.totalorder %s17, 0
      %p79 = por %p77, %p78
      %p80 = scmp.ne.s32.totalorder %s69, %s72
      %p81 = scmp.eq.s32.totalorder %s22, 1
      %p82 = por %p80, %p81
      %p83 = scmp.ne.s32.totalorder %s72, %s73
      %p84 = scmp.eq.s32.totalorder %s22, 0
      %p85 = por %p83, %p84
      %p86 = scmp.ne.s32.totalorder %s72, %s73
      %p87 = scmp.eq.s32.totalorder %s23, 1
      %p88 = por %p86, %p87
      %p90 = scmp.ne.s32.totalorder %s73, %s89
      %p91 = scmp.eq.s32.totalorder %s23, 0
      %p92 = por %p90, %p91
      %s93 = ssub.s32 %s24, %s36
      %s94 = ssub.s32 %s25, %s32
      %s95 = sor.u32 %s93, %s94
      %p96 = scmp.eq.s32.totalorder %s95, 0
      %s98 = sadd.s32 %s97, 1
      %s99 = scalar_select %p96, %s97, %s98
      %p102 = pneg %p96
      %p103 = scmp.eq.s32.totalorder %s17, 1
      %p104 = por %p102, %p103
      %p105 = scmp.ne.s32.totalorder %s97, %s100
      %p106 = scmp.eq.s32.totalorder %s17, 0
      %p107 = por %p105, %p106
      %p108 = scmp.ne.s32.totalorder %s97, %s100
      %p109 = scmp.eq.s32.totalorder %s22, 1
      %p110 = por %p108, %p109
      %p111 = scmp.ne.s32.totalorder %s100, %s101
      %p112 = scmp.eq.s32.totalorder %s22, 0
      %p113 = por %p111, %p112
      %p114 = scmp.ne.s32.totalorder %s100, %s101
      %p115 = scmp.eq.s32.totalorder %s23, 1
      %p116 = por %p114, %p115
      %p118 = scmp.ne.s32.totalorder %s101, %s117
      %p119 = scmp.eq.s32.totalorder %s23, 0
      %p120 = por %p118, %p119
      %s121 = ssub.s32 %s24, %s36
      %p122 = scmp.eq.s32.totalorder %s121, 0
      %s124 = sadd.s32 %s123, 1
      %s125 = scalar_select %p122, %s123, %s124
      %p128 = pneg %p122
      %p129 = scmp.eq.s32.totalorder %s17, 1
      %p130 = por %p128, %p129
      %p131 = scmp.ne.s32.totalorder %s123, %s126
      %p132 = scmp.eq.s32.totalorder %s17, 0
      %p133 = por %p131, %p132
      %p134 = scmp.ne.s32.totalorder %s123, %s126
      %p135 = scmp.eq.s32.totalorder %s22, 1
      %p136 = por %p134, %p135
      %p137 = scmp.ne.s32.totalorder %s126, %s127
      %p138 = scmp.eq.s32.totalorder %s22, 0
      %p139 = por %p137, %p138
      %p140 = scmp.ne.s32.totalorder %s126, %s127
      %p141 = scmp.eq.s32.totalorder %s23, 1
      %p142 = por %p140, %p141
      %p144 = scmp.ne.s32.totalorder %s127, %s143
      %p145 = scmp.eq.s32.totalorder %s23, 0
      %p146 = por %p144, %p145
      %s147 = ssub.s32 %s24, %s36
      %p148 = scmp.eq.s32.totalorder %s147, 0
      %s150 = sadd.s32 %s149, 1
      %s151 = scalar_select %p148, %s149, %s150
      %p154 = pneg %p148
      %p155 = scmp.eq.s32.totalorder %s17, 1
      %p156 = por %p154, %p155
      %p157 = scmp.ne.s32.totalorder %s149, %s152
      %p158 = scmp.eq.s32.totalorder %s17, 0
      %p159 = por %p157, %p158
      %p160 = scmp.ne.s32.totalorder %s149, %s152
      %p161 = scmp.eq.s32.totalorder %s22, 1
      %p162 = por %p160, %p161
      %p163 = scmp.ne.s32.totalorder %s152, %s153
      %p164 = scmp.eq.s32.totalorder %s22, 0
      %p165 = por %p163, %p164
      %p166 = scmp.ne.s32.totalorder %s152, %s153
      %p167 = scmp.eq.s32.totalorder %s23, 1
      %p168 = por %p166, %p167
      %p170 = scmp.ne.s32.totalorder %s153, %s169
      %p171 = scmp.eq.s32.totalorder %s23, 0
      %p172 = por %p170, %p171
      %p173 = scmp.le.s32.totalorder 1, %s17
      %p174 = scmp.lt.s32.totalorder %s17, 3
      %p175 = pnand %p173, %p174
      %p176 = pneg %p175
      // Predicated region
      $region9: #{tpu_custom_call.1} parent=5 // pred_check
        _
      $region10: #{tpu_custom_call.1} parent=5 // pred_check_branch
        %178 = sbr.rel (%p175) target = $region12
      $region11: #{tpu_custom_call.1} parent=5 // pred_region
        %s179 = ssub.s32 %s17, 1
      $region12: #{tpu_custom_call.1} parent=5 // pred_fallthru
        _
      %p180 = scmp.lt.s32.totalorder %s17, 2
      // Predicated region
      $region13: #{tpu_custom_call.1} parent=5 // pred_check
        %p181 = pneg %p180
      $region14: #{tpu_custom_call.1} parent=5 // pred_check_branch
        %183 = sbr.rel (%p181) target = $region16
      $region15: #{tpu_custom_call.1} parent=5 // pred_region
        // Predicated region
        $region17: #{tpu_custom_call.1} parent=15 // pred_check
          %p184 = pneg %p51
        $region18: #{tpu_custom_call.1} parent=15 // pred_check_branch
          %186 = sbr.rel (%p184) target = $region20
        $region19: #{tpu_custom_call.1} parent=15 // pred_region
          %s187 = sand.u32 %s41, 1
          %s188 = scalar_lea.sflag [#allocation5], %s187
          %s189 = sand.u32 %s41, 1
          %s190 = smul.addr %s189, 16
          %s191 = scalar_lea.vmem [#allocation4], %s190
          %s192 = smul.u32 2, %s25
          %s194 = ssub.s32 256, 256
          %195 = vsyncadd %s188, %s194
          %s196 = smul.addr %s24, 2
          %s197 = sadd.s32 %s192, %s196
          %s198 = smul.addr %s197, 128
          %s199 = scalar_lea.hbm %s0, %s198
          %s201 = sshll.u32 %s191, 4
          %s202 = int_to_ptr.vmem [resolvable:$true] %s201
          %204 = dma.hbm_to_vmem [thread:$0]  %s199, 256, %s202, %s188
        $region20: #{tpu_custom_call.1} parent=15 // pred_fallthru
          _
        // Predicated region
        $region21: #{tpu_custom_call.1} parent=15 // pred_check
          %p205 = pneg %p79
        $region22: #{tpu_custom_call.1} parent=15 // pred_check_branch
          %207 = sbr.rel (%p205) target = $region24
        $region23: #{tpu_custom_call.1} parent=15 // pred_region
          %s208 = sand.u32 %s17, 1
          %s209 = scalar_lea.sflag [#allocation7], %s208
          %s210 = sand.u32 %s69, 1
          %s211 = smul.addr %s210, 16
          %s212 = scalar_lea.vmem [#allocation6], %s211
          %s213 = smul.u32 2, %s25
          %s215 = ssub.s32 256, 256
          %216 = vsyncadd %s209, %s215
          %s217 = smul.addr %s24, 2
          %s218 = sadd.s32 %s213, %s217
          %s219 = smul.addr %s218, 128
          %s220 = scalar_lea.hbm %s1, %s219
          %s222 = sshll.u32 %s212, 4
          %s223 = int_to_ptr.vmem [resolvable:$true] %s222
          %225 = dma.hbm_to_vmem [thread:$0]  %s220, 256, %s223, %s209
        $region24: #{tpu_custom_call.1} parent=15 // pred_fallthru
          _
        // Predicated region
        $region25: #{tpu_custom_call.1} parent=15 // pred_check
          %p226 = pneg %p107
        $region26: #{tpu_custom_call.1} parent=15 // pred_check_branch
          %228 = sbr.rel (%p226) target = $region28
        $region27: #{tpu_custom_call.1} parent=15 // pred_region
          %s229 = sand.u32 %s17, 1
          %s230 = scalar_lea.sflag [#allocation7], %s229
          %s231 = sand.u32 %s97, 1
          %s232 = smul.addr %s231, 16
          %s233 = scalar_lea.vmem [#allocation8], %s232
          %s234 = smul.u32 2, %s25
          %s236 = ssub.s32 256, 256
          %237 = vsyncadd %s230, %s236
          %s238 = smul.addr %s24, 2
          %s239 = sadd.s32 %s234, %s238
          %s240 = smul.addr %s239, 128
          %s241 = scalar_lea.hbm %s2, %s240
          %s243 = sshll.u32 %s233, 4
          %s244 = int_to_ptr.vmem [resolvable:$true] %s243
          %246 = dma.hbm_to_vmem [thread:$0]  %s241, 256, %s244, %s230
        $region28: #{tpu_custom_call.1} parent=15 // pred_fallthru
          _
      $region16: #{tpu_custom_call.1} parent=5 // pred_fallthru
        _
      %p247 = scmp.le.s32.totalorder 1, %s17
      %p248 = scmp.lt.s32.totalorder %s17, 3
      %p249 = pnand %p247, %p248
      %p250 = pneg %p249
      // Predicated region
      $region29: #{tpu_custom_call.1} parent=5 // pred_check
        _
      $region30: #{tpu_custom_call.1} parent=5 // pred_check_branch
        %252 = sbr.rel (%p249) target = $region32
      $region31: #{tpu_custom_call.1} parent=5 // pred_region
        %s253 = ssub.s32 %s17, 1
        %s254 = sand.u32 %s44, 1
        %s255 = scalar_lea.sflag [#allocation5], %s254
        %s256 = sand.u32 %s44, 1
        %s257 = smul.addr %s256, 16
        %s258 = scalar_lea.vmem [#allocation4], %s257
        // Predicated region
        $region33: #{tpu_custom_call.1} parent=31 // pred_check
          %p259 = pneg %p57
        $region34: #{tpu_custom_call.1} parent=31 // pred_check_branch
          %261 = sbr.rel (%p259) target = $region36
        $region35: #{tpu_custom_call.1} parent=31 // pred_region
          %262 = dma.done %s255, 256
        $region36: #{tpu_custom_call.1} parent=31 // pred_fallthru
          _
        %s263 = sand.u32 %s22, 1
        %s264 = scalar_lea.sflag [#allocation7], %s263
        %s265 = sand.u32 %s72, 1
        %s266 = smul.addr %s265, 16
        %s267 = scalar_lea.vmem [#allocation6], %s266
        // Predicated region
        $region37: #{tpu_custom_call.1} parent=31 // pred_check
          %p268 = pneg %p85
        $region38: #{tpu_custom_call.1} parent=31 // pred_check_branch
          %270 = sbr.rel (%p268) target = $region40
        $region39: #{tpu_custom_call.1} parent=31 // pred_region
          %271 = dma.done %s264, 256
        $region40: #{tpu_custom_call.1} parent=31 // pred_fallthru
          _
        %s272 = sand.u32 %s22, 1
        %s273 = scalar_lea.sflag [#allocation7], %s272
        %s274 = sand.u32 %s100, 1
        %s275 = smul.addr %s274, 16
        %s276 = scalar_lea.vmem [#allocation8], %s275
        // Predicated region
        $region41: #{tpu_custom_call.1} parent=31 // pred_check
          %p277 = pneg %p113
        $region42: #{tpu_custom_call.1} parent=31 // pred_check_branch
          %279 = sbr.rel (%p277) target = $region44
        $region43: #{tpu_custom_call.1} parent=31 // pred_region
          %280 = dma.done %s273, 256
        $region44: #{tpu_custom_call.1} parent=31 // pred_fallthru
          _
        %s281 = sand.u32 %s44, 1
        %s282 = scalar_lea.sflag [#allocation5], %s281
        %s283 = sand.u32 %s44, 1
        %s284 = smul.addr %s283, 16
        %s285 = scalar_lea.vmem [#allocation4], %s284
        %p286 = pneg %p57
        %p287 = pneg %p54
        %s288 = sand.u32 %s22, 1
        %s289 = scalar_lea.sflag [#allocation7], %s288
        %s290 = sand.u32 %s72, 1
        %s291 = smul.addr %s290, 16
        %s292 = scalar_lea.vmem [#allocation6], %s291
        %p293 = pneg %p85
        %p294 = pneg %p82
        %s295 = sand.u32 %s22, 1
        %s296 = scalar_lea.sflag [#allocation7], %s295
        %s297 = sand.u32 %s100, 1
        %s298 = smul.addr %s297, 16
        %s299 = scalar_lea.vmem [#allocation8], %s298
        %p300 = pneg %p113
        %p301 = pneg %p110
        %p302 = pneg %p139
        %p303 = pneg %p136
        %p304 = scmp.lt.s32.totalorder %s26, 1
        %s305 = scalar_select %p304, %s26, 1
        %s306 = smul.addr %s305, 8
        %s307 = scalar_lea.vmem %s3, %s306
        %p308 = pneg %p165
        %p309 = pneg %p162
        %p310 = scmp.lt.s32.totalorder %s26, 1
        %s311 = scalar_select %p310, %s26, 1
        %s312 = smul.addr %s311, 8
        %s313 = scalar_lea.vmem %s4, %s312
        %s314 = smul.u32 2, %s27
        %s315 = smul.u32 2, %s27
        %s316 = smul.u32 2, %s27
        %p317 = scmp.lt.s32.totalorder %s26, 1
        %s318 = scalar_select %p317, %s26, 1
        %s319 = smul.addr %s318, 8
        %s320 = scalar_lea.vmem %s3, %s319
        %p321 = scmp.lt.s32.totalorder %s26, 1
        %s322 = scalar_select %p321, %s26, 1
        %s323 = smul.addr %s322, 8
        %s324 = scalar_lea.vmem %s4, %s323
        %v325 = vld [vmem:[%s258] sm:$0xff]
        %v326 = vld [vmem:[%s258 + $0x8] sm:$0xff]
        %v327 = vld [vmem:[%s267] sm:$0xff]
        %v328 = vld [vmem:[%s267 + $0x8] sm:$0xff]
        %v329 = vld [vmem:[%s276] sm:$0xff]
        %v330 = vld [vmem:[%s276 + $0x8] sm:$0xff]
        %vm331 = vcmp.ge.f32.partialorder %v327, 0.46242648
        %vm332 = vcmp.ge.f32.partialorder %v328, 0.46242648
        %v333 = vsel %vm331, 2.0, 1.0
        %v334 = vsel %vm332, 2.0, 1.0
        %vm335 = vcmp.ge.f32.partialorder %v327, 0.55111027
        %vm336 = vcmp.ge.f32.partialorder %v328, 0.55111027
        %v337 = vsel %vm335, 5.0, %v333
        %v338 = vsel %vm336, 5.0, %v334
        %vm339 = vcmp.ge.f32.partialorder %v327, 0.6181969
        %vm340 = vcmp.ge.f32.partialorder %v328, 0.6181969
        %v341 = vsel %vm339, 10.0, %v337
        %v342 = vsel %vm340, 10.0, %v338
        %vm343 = vcmp.ge.f32.partialorder %v327, 0.7245268
        %vm344 = vcmp.ge.f32.partialorder %v328, 0.7245268
        %v345 = vsel %vm343, 30.0, %v341
        %v346 = vsel %vm344, 30.0, %v342
        %v347 = vmul.f32 %v345, %v329
        %v348 = vmul.f32 %v346, %v330
        %v349 = vsub.f32 %v325, %v327
        %v350 = vsub.f32 %v326, %v328
        %v351 = vand.u32 2147483647, %v349
        %v352 = vand.u32 2147483647, %v350
        %v353 = vmul.f32 %v347, %v351
        %v354 = vmul.f32 %v348, %v352
        %v355 = vmul.f32 %v353, %v351
        %v356 = vmul.f32 %v354, %v352
        %v357 = vadd.f32 %v355, %v356
        %358 = vadd.xlane.f32.xlu0 %v357
        %v359 = vpop.xlane.xlu0 %358
        %vm360 = vcmask 7168
        %361 = vst.msk [vmem:[%s320] sm:$0xff] %vm360, %v359
        %v362 = vadd.f32 %v353, %v354
        %363 = vadd.xlane.f32.xlu0 %v362
        %v364 = vpop.xlane.xlu0 %363
        %365 = vst.msk [vmem:[%s324] sm:$0xff] %vm360, %v364
        %p366 = scmp.lt.s32.totalorder %s26, 1
        %s367 = scalar_select %p366, %s26, 1
        %s368 = smul.addr %s367, 8
        %s369 = scalar_lea.vmem %s3, %s368
        %p370 = scmp.lt.s32.totalorder %s26, 1
        %s371 = scalar_select %p370, %s26, 1
        %s372 = smul.addr %s371, 8
        %s373 = scalar_lea.vmem %s4, %s372
        // Predicated region
        $region45: #{tpu_custom_call.1} parent=31 // pred_check
          %p374 = pneg %p136
        $region46: #{tpu_custom_call.1} parent=31 // pred_check_branch
          %376 = sbr.rel (%p374) target = $region48
        $region47: #{tpu_custom_call.1} parent=31 // pred_region
          _
        $region48: #{tpu_custom_call.1} parent=31 // pred_fallthru
          _
        // Predicated region
        $region49: #{tpu_custom_call.1} parent=31 // pred_check
          %p377 = pneg %p162
        $region50: #{tpu_custom_call.1} parent=31 // pred_check_branch
          %379 = sbr.rel (%p377) target = $region52
        $region51: #{tpu_custom_call.1} parent=31 // pred_region
          _
        $region52: #{tpu_custom_call.1} parent=31 // pred_fallthru
          _
      $region32: #{tpu_custom_call.1} parent=5 // pred_fallthru
        _
      %p380 = scmp.le.s32.totalorder 2, %s17
      // Predicated region
      $region53: #{tpu_custom_call.1} parent=5 // pred_check
        %p381 = pneg %p380
      $region54: #{tpu_custom_call.1} parent=5 // pred_check_branch
        %383 = sbr.rel (%p381) target = $region56
      $region55: #{tpu_custom_call.1} parent=5 // pred_region
        %s384 = ssub.s32 %s17, 2
        // Predicated region
        $region57: #{tpu_custom_call.1} parent=55 // pred_check
          %p385 = pneg %p142
        $region58: #{tpu_custom_call.1} parent=55 // pred_check_branch
          %387 = sbr.rel (%p385) target = $region60
        $region59: #{tpu_custom_call.1} parent=55 // pred_region
          %p388 = scmp.lt.s32.totalorder %s28, 1
          %s389 = scalar_select %p388, %s28, 1
          %s390 = smul.addr %s389, 8
          %s391 = scalar_lea.vmem %s3, %s390
        $region60: #{tpu_custom_call.1} parent=55 // pred_fallthru
          _
        // Predicated region
        $region61: #{tpu_custom_call.1} parent=55 // pred_check
          %p392 = pneg %p168
        $region62: #{tpu_custom_call.1} parent=55 // pred_check_branch
          %394 = sbr.rel (%p392) target = $region64
        $region63: #{tpu_custom_call.1} parent=55 // pred_region
          %p395 = scmp.lt.s32.totalorder %s28, 1
          %s396 = scalar_select %p395, %s28, 1
          %s397 = smul.addr %s396, 8
          %s398 = scalar_lea.vmem %s4, %s397
        $region64: #{tpu_custom_call.1} parent=55 // pred_fallthru
          _
      $region56: #{tpu_custom_call.1} parent=5 // pred_fallthru
        _
    $region6: #{tpu_custom_call.1} parent=1 // loop_footer
      %s21 = sadd.s32 1, %s17
    $region7: #{tpu_custom_call.1} parent=1 // loop_footer_branch
      %16 = sbr.rel target = $region3
    $region8: #{tpu_custom_call.1} parent=1 // loop_exit
      _
    %399 = vsyncpa [#allocation5], 1
    %s400 = scalar_lea.sflag [#allocation5], 1
    %401 = vsyncpa %s400, 1
    %402 = vsyncpa [#allocation7], 1
    %s403 = scalar_lea.sflag [#allocation7], 1
    %404 = vsyncpa %s403, 1

</llo_original>
